<compile_context>
chip_gen: v7x
topology: tpu7x:2x2x1
jax: 0.10.0
libtpu: 0.0.40
codegen_flags: <defaults>
</compile_context>

<pallas_src>
import functools

import jax
import jax.numpy as jnp
from jax.experimental import pallas as pl
from jax.experimental.pallas import tpu as pltpu


def _avgpool_kernel(x_ref, o_ref, acc_ref, *, inv_hw):
    """Process one (N, C_T, HW_T) tile; reduce over the HW grid axis."""
    s = pl.program_id(1)  # spatial (reduction) grid axis — last, 'arbitrary'

    @pl.when(s == 0)
    def _init():
        acc_ref[...] = jnp.zeros_like(acc_ref)

    x = x_ref[...].astype(jnp.float32)       # bf16/f32 DMA'd as-is, accumulate in f32
    acc_ref[...] += jnp.sum(x, axis=-1)      # (N, C_T)

    @pl.when(s == pl.num_programs(1) - 1)
    def _finalize():
        o_ref[...] = (acc_ref[...] * inv_hw).astype(o_ref.dtype)


def _tile_options(total, align):
    """Divisors of `total` that are multiples of `align` (descending); else [total]."""
    opts = [t for t in range(total, 0, -align) if t % align == 0 and total % t == 0]
    return opts if opts else [total]


def _pick_tiles(n, c, hw, itemsize, budget_bytes):
    """Largest (C_T, HW_T) whose input tile fits the per-buffer VMEM budget."""
    c_opts = _tile_options(c, 128)     # keep output lane-dense: C_T multiple of 128 or full C
    hw_opts = _tile_options(hw, 128)   # lane-aligned spatial chunks, or full HW if not /128
    for c_t in c_opts:
        for hw_t in hw_opts:
            if n * c_t * hw_t * itemsize <= budget_bytes:
                return c_t, hw_t
    return c_opts[-1], hw_opts[-1]     # fall back to smallest available tiles


def avg_pool_neck_forward(x, *, vmem_budget_bytes=8 * 1024 * 1024):
    """Pallas implementation of AvgPoolNeck.forward.

    x: list/tuple of one NCHW array.  Returns [pooled] with shape (N, C, 1, 1),
    matching nn.AdaptiveAvgPool2d((1, 1)).
    """
    assert isinstance(x, (list, tuple)) and len(x) == 1
    xt = x[0]
    N, C, H, W = xt.shape
    HW = H * W
    x3 = xt.reshape(N, C, HW)

    itemsize = jnp.dtype(xt.dtype).itemsize
    c_t, hw_t = _pick_tiles(N, C, HW, itemsize, vmem_budget_bytes)
    grid = (C // c_t, HW // hw_t)  # (channel tiles: parallel, spatial tiles: reduction)

    kernel = functools.partial(_avgpool_kernel, inv_hw=float(1.0 / HW))

    pooled = pl.pallas_call(
        kernel,
        out_shape=jax.ShapeDtypeStruct((N, C), xt.dtype),
        grid_spec=pltpu.PrefetchScalarGridSpec(
            num_scalar_prefetch=0,
            grid=grid,
            in_specs=[pl.BlockSpec((N, c_t, hw_t), lambda c, s: (0, c, s))],
            out_specs=pl.BlockSpec((N, c_t), lambda c, s: (0, c)),
            scratch_shapes=[pltpu.VMEM((N, c_t), jnp.float32)],
        ),
        compiler_params=pltpu.CompilerParams(
            dimension_semantics=("parallel", "arbitrary"),
            vmem_limit_bytes=32 * 1024 * 1024,
        ),
    )(x3)

    return [pooled.reshape(N, C, 1, 1)]


if __name__ == "__main__":
    key = jax.random.PRNGKey(0)

    # Small shape consistent with the module's forward (list of one NCHW tensor).
    N, C, H, W = 2, 4, 16, 16
    x = jax.random.normal(key, (N, C, H, W), dtype=jnp.float32)

    out = avg_pool_neck_forward([x])
    jax.block_until_ready(out)

    assert len(out) == 1 and out[0].shape == (N, C, 1, 1)
    ref = x.mean(axis=(2, 3)).reshape(N, C, 1, 1)
    assert jnp.allclose(out[0], ref, atol=1e-6, rtol=1e-6), "avg-pool mismatch"

    # Also exercise the tiled path (channel grid + spatial reduction grid) and the
    # bf16 pass-through with a tight VMEM budget to force multi-step pipelining.
    N2, C2, H2, W2 = 8, 256, 16, 16
    x2 = jax.random.normal(jax.random.PRNGKey(1), (N2, C2, H2, W2)).astype(jnp.bfloat16)
    out2 = avg_pool_neck_forward([x2], vmem_budget_bytes=256 * 1024)
    jax.block_until_ready(out2)
    ref2 = x2.astype(jnp.float32).mean(axis=(2, 3)).reshape(N2, C2, 1, 1)
    assert jnp.allclose(out2[0].astype(jnp.float32), ref2, atol=2e-2), "bf16 pool mismatch"

    print("KERNEL_OK")
</pallas_src>

<mosaic_0001>
module attributes {stable_mosaic.version = 11 : i64} {
  func.func @_avgpool_kernel(%arg0: i32, %arg1: i32, %arg2: memref<2x4x256xf32, #tpu.memory_space<vmem>>, %arg3: memref<2x4xf32, #tpu.memory_space<vmem>>, %arg4: memref<2x4xf32, #tpu.memory_space<vmem>>) attributes {dimension_semantics = [#tpu.dimension_semantics<parallel>, #tpu.dimension_semantics<arbitrary>], iteration_bounds = array<i64: 1, 1>, scalar_prefetch = 0 : i64, scratch_operands = 1 : i64, tpu.core_type = #tpu.core_type<tc>, window_params = [{transform_indices = @transform_0, window_bounds = array<i64: 2, 4, 256>}, {transform_indices = @transform_1, window_bounds = array<i64: 2, 4>}]} {
    %c0_i32 = arith.constant 0 : i32
    %0 = arith.cmpi eq, %arg1, %c0_i32 : i32
    %1 = arith.extui %0 : i1 to i32
    %c0_i32_0 = arith.constant 0 : i32
    %2 = arith.cmpi ne, %1, %c0_i32_0 : i32
    scf.if %2 {
      %cst_9 = arith.constant 0.000000e+00 : f32
      %11 = vector.broadcast %cst_9 : f32 to vector<2x4xf32>
      %c0_10 = arith.constant 0 : index
      %c0_11 = arith.constant 0 : index
      %12 = vector.load %arg4[%c0_10, %c0_11] : memref<2x4xf32, #tpu.memory_space<vmem>>, vector<2x4xf32>
      tpu.vector_store %arg4[%c0_10, %c0_11], %11 {strides = array<i32>} : memref<2x4xf32, #tpu.memory_space<vmem>>, vector<2x4xf32>,
    } else {
    }
    %c0 = arith.constant 0 : index
    %c0_1 = arith.constant 0 : index
    %c0_2 = arith.constant 0 : index
    %3 = vector.load %arg2[%c0, %c0_1, %c0_2] : memref<2x4x256xf32, #tpu.memory_space<vmem>>, vector<2x4x256xf32>
    %c0_3 = arith.constant 0 : index
    %c0_4 = arith.constant 0 : index
    %4 = vector.load %arg4[%c0_3, %c0_4] : memref<2x4xf32, #tpu.memory_space<vmem>>, vector<2x4xf32>
    %cst = arith.constant dense<0.000000e+00> : vector<2x4xf32>
    %5 = vector.multi_reduction <add>, %3, %cst [2] : vector<2x4x256xf32> to vector<2x4xf32>
    %6 = arith.addf %4, %5 : vector<2x4xf32>
    %c0_5 = arith.constant 0 : index
    %c0_6 = arith.constant 0 : index
    %7 = vector.load %arg4[%c0_5, %c0_6] : memref<2x4xf32, #tpu.memory_space<vmem>>, vector<2x4xf32>
    tpu.vector_store %arg4[%c0_5, %c0_6], %6 {strides = array<i32>} : memref<2x4xf32, #tpu.memory_space<vmem>>, vector<2x4xf32>,
    %c0_i32_7 = arith.constant 0 : i32
    %8 = arith.cmpi eq, %arg1, %c0_i32_7 : i32
    %9 = arith.extui %8 : i1 to i32
    %c0_i32_8 = arith.constant 0 : i32
    %10 = arith.cmpi ne, %9, %c0_i32_8 : i32
    scf.if %10 {
      %c0_9 = arith.constant 0 : index
      %c0_10 = arith.constant 0 : index
      %11 = vector.load %arg4[%c0_9, %c0_10] : memref<2x4xf32, #tpu.memory_space<vmem>>, vector<2x4xf32>
      %cst_11 = arith.constant 3.906250e-03 : f32
      %12 = vector.broadcast %cst_11 : f32 to vector<2x4xf32>
      %13 = arith.mulf %11, %12 : vector<2x4xf32>
      %c0_12 = arith.constant 0 : index
      %c0_13 = arith.constant 0 : index
      %14 = vector.load %arg3[%c0_12, %c0_13] : memref<2x4xf32, #tpu.memory_space<vmem>>, vector<2x4xf32>
      tpu.vector_store %arg3[%c0_12, %c0_13], %13 {strides = array<i32>} : memref<2x4xf32, #tpu.memory_space<vmem>>, vector<2x4xf32>,
    } else {
    }
    return
  }
  func.func @transform_0(%arg0: i32, %arg1: i32) -> (i32, i32, i32) {
    %c0_i32 = arith.constant 0 : i32
    %c0_i32_0 = arith.constant 0 : i32
    return %c0_i32, %arg0, %arg1 : i32, i32, i32
  }
  func.func @transform_1(%arg0: i32, %arg1: i32) -> (i32, i32) {
    %c0_i32 = arith.constant 0 : i32
    %c0_i32_0 = arith.constant 0 : i32
    return %c0_i32, %arg0 : i32, i32
  }
}

</mosaic_0001>

<llo_original>
// kernel: tpu_custom_call.1
$region0: #{tpu_custom_call.1}
  #allocation0 [shape = 'u32[]', space=smem, size = 0x4, offset = 0x4, fixed_abs, tag = 'smem constant byte address 0x4 - core index']
  #allocation1 [shape = 'u32[144,128]{1,0:T(1,128)}', space=vmem, size = 0x12000, scoped, tag = 'internal scratch']
  #allocation2 [shape = 'f32[2,4]{1,0:T(2,128)}', space=vmem, size = 0x400, scoped, tag = 'scratch operand']
  %s0 = inlined_call_operand.hbm [shape: f32[2,4,256], index: 0, kind: input, shape index: {}]
  %s1 = inlined_call_operand.hbm [shape: f32[2,4], index: 1, kind: output, shape index: {}]
  %s2 = sld [smem:[#allocation0]]
  $region26: #{tpu_custom_call.1} parent=0
    _
  %s4 = ssub.s32 1, %s2
  %s5 = scalar_select 0, %s4, %s2
  $region1: #{tpu_custom_call.1} parent=0
    #allocation3 [shape = 'u8[8192]{0}', space=vmem, size = 0x2000, scoped, tag = 'input window, operand 0, single buffered']
    #allocation4 [shape = 's32[1]{0}', space=sflag, size = 0x4, scoped, tag = 'scoped memory for tpu_custom_call.1']
    #allocation5 [shape = 's32[1]{0}', space=sflag, size = 0x4, scoped, tag = 'scoped memory for tpu_custom_call.1']
    #allocation6 [shape = 'u8[1024]{0}', space=vmem, size = 0x400, scoped, tag = 'output window, operand 0, single buffered']
    %6 = vsyncpa [#allocation4], 0
    %7 = vsyncpa [#allocation5], 0
    // Predicated region
    $region2: #{tpu_custom_call.1} parent=1 // pred_check
      _
    $region3: #{tpu_custom_call.1} parent=1 // pred_check_branch
      %9 = sbr.rel (0) target = $region5
    $region4: #{tpu_custom_call.1} parent=1 // pred_region
      %s11 = ssub.s32 256, 256
      %12 = vsyncadd [#allocation4], %s11
      %s13 = sshll.u32 [#allocation3], 4
      %s14 = int_to_ptr.vmem [resolvable:$true] %s13
      %19 = dma.hbm_to_vmem [thread:$0]  %s0, 256, %s14, [#allocation4], 128, 128, 8
    $region5: #{tpu_custom_call.1} parent=1 // pred_fallthru
      _
    // Predicated region
    $region6: #{tpu_custom_call.1} parent=1 // pred_check
      _
    $region7: #{tpu_custom_call.1} parent=1 // pred_check_branch
      %21 = sbr.rel (0) target = $region9
    $region8: #{tpu_custom_call.1} parent=1 // pred_region
      %22 = dma.done [#allocation4], 256
    $region9: #{tpu_custom_call.1} parent=1 // pred_fallthru
      _
    %p23 = scmp.eq.s32.totalorder 0, 0
    // Predicated region
    $region10: #{tpu_custom_call.1} parent=1 // pred_check
      %p24 = pneg %p23
    $region11: #{tpu_custom_call.1} parent=1 // pred_check_branch
      %26 = sbr.rel (%p24) target = $region13
    $region12: #{tpu_custom_call.1} parent=1 // pred_region
      %vm27 = vcmask 25600
      %28 = vst.msk [vmem:[#allocation2] sm:$0x3] %vm27, 0.0
    $region13: #{tpu_custom_call.1} parent=1 // pred_fallthru
      _
    %v29 = vld [vmem:[#allocation3] sm:$0xff]
    %v30 = vld [vmem:[#allocation3 + $0x8] sm:$0xff]
    %v31 = vld [vmem:[#allocation2] sm:$0x3]
    %v34 = vcombine.high %v29, %v29
    %v35 = vcombine.high %v30, %v30
    %vm38 = vcmask 1043456
    %v39 = vsel %vm38, %v29, 0.0
    %v40 = vsel %vm38, %v34, 0.0
    %v41 = vadd.f32 %v39, %v40
    %42 = vadd.xlane.f32.xlu0 %v41
    %v43 = vpop.xlane.xlu0 %42
    %v44 = vsel %vm38, %v30, 0.0
    %v45 = vsel %vm38, %v35, 0.0
    %v46 = vadd.f32 %v44, %v45
    %47 = vadd.xlane.f32.xlu0 %v46
    %v48 = vpop.xlane.xlu0 %47
    %v51 = vlaneseq
    %v52 = vand.u32 %v51, 127
    %v53 = vlaneseq
    %v54 = vshrl.u32 %v53, 7
    %v55 = vsub.s32 %v52, %v54
    %v56 = vrot.slane %v43, %v55
    %v57 = vlaneseq
    %v58 = vshrl.u32 %v57, 7
    %v59 = vsub.s32 %v52, %v58
    %v60 = vrot.slane %v48, %v59
    %vm61 = vcmask 1041409
    %v62 = vsel %vm61, %v60, %v56
    %v64 = vadd.f32 %v31, %v62
    %vm65 = vcmask 25600
    %66 = vst.msk [vmem:[#allocation2] sm:$0x3] %vm65, %v64
    // Predicated region
    $region14: #{tpu_custom_call.1} parent=1 // pred_check
      %p67 = pneg %p23
    $region15: #{tpu_custom_call.1} parent=1 // pred_check_branch
      %69 = sbr.rel (%p67) target = $region17
    $region16: #{tpu_custom_call.1} parent=1 // pred_region
      %v70 = vld [vmem:[#allocation2] sm:$0x3]
      %v71 = vmul.f32 %v70, 0.00390625
      %72 = vst.msk [vmem:[#allocation6] sm:$0x3] %vm65, %v71
    $region17: #{tpu_custom_call.1} parent=1 // pred_fallthru
      _
    // Predicated region
    $region18: #{tpu_custom_call.1} parent=1 // pred_check
      _
    $region19: #{tpu_custom_call.1} parent=1 // pred_check_branch
      %74 = sbr.rel (0) target = $region21
    $region20: #{tpu_custom_call.1} parent=1 // pred_region
      %s76 = ssub.s32 32, 32
      %77 = vsyncadd [#allocation5], %s76
      %s79 = sshll.u32 [#allocation6], 4
      %s80 = int_to_ptr.vmem [resolvable:$true] %s79
      %82 = dma.vmem_to_hbm [thread:$0]  %s80, 32, %s1, [#allocation5]
    $region21: #{tpu_custom_call.1} parent=1 // pred_fallthru
      _
    // Predicated region
    $region22: #{tpu_custom_call.1} parent=1 // pred_check
      _
    $region23: #{tpu_custom_call.1} parent=1 // pred_check_branch
      %84 = sbr.rel (0) target = $region25
    $region24: #{tpu_custom_call.1} parent=1 // pred_region
      %85 = dma.done [#allocation5], 32
    $region25: #{tpu_custom_call.1} parent=1 // pred_fallthru
      _
    %86 = vsyncpa [#allocation4], 1
    %87 = vsyncpa [#allocation5], 1

</llo_original>
